<compile_context>
chip_gen: v6e
topology: v6e:2x2x1
jax: 0.10.0
libtpu: 0.0.40
codegen_flags: <defaults>
</compile_context>

<pallas_src>
import functools

import jax
import jax.numpy as jnp
from jax.experimental import pallas as pl
from jax.experimental.pallas import tpu as pltpu


def _round_up(n, m):
    return ((n + m - 1) // m) * m


def _pick_tile_m(n_rows, sublane_mult):
    """Row-tile size: big enough for HBM roofline, small enough for VMEM and
    for >=8 grid steps (v7x megacore) when there are plenty of rows."""
    cap = 2048      # 1 MiB/operand/step at H=128 f32; fits v5e 16 MiB scoped VMEM
    floor = 256     # below this, per-step overhead starts to dominate
    tm = min(cap, _round_up(n_rows, sublane_mult))
    while tm > floor and pl.cdiv(n_rows, tm) < 8:
        tm //= 2
    tm = max(sublane_mult, (tm // sublane_mult) * sublane_mult)
    return tm


def _layernorm_store(x, g_ref, b_ref, o_ref, eps):
    # x: (TM, H) f32.  Per-row LayerNorm over the last (lane) dim.
    mean = jnp.mean(x, axis=-1, keepdims=True)
    xc = x - mean
    var = jnp.mean(xc * xc, axis=-1, keepdims=True)
    inv = jax.lax.rsqrt(var + eps)                       # EUP slot
    y = xc * inv * g_ref[...] + b_ref[...]
    o_ref[...] = y.astype(o_ref.dtype)


def _add2_ln_kernel(x1_ref, x2_ref, g_ref, b_ref, o_ref, *, eps):
    x = x1_ref[...].astype(jnp.float32) + x2_ref[...].astype(jnp.float32)
    _layernorm_store(x, g_ref, b_ref, o_ref, eps)


def _add3_ln_kernel(x1_ref, x2_ref, x3_ref, g_ref, b_ref, o_ref, *, eps):
    x = (x1_ref[...].astype(jnp.float32)
         + x2_ref[...].astype(jnp.float32)
         + x3_ref[...].astype(jnp.float32))
    _layernorm_store(x, g_ref, b_ref, o_ref, eps)


def add_and_norm(x1, x2, x3=None, *, gamma, beta, eps=1e-5, tile_m=None):
    """Pallas implementation of AddAndNorm.forward.

    x1, x2[, x3] : (..., H)  float32 or bfloat16
    gamma, beta  : (H,)      LayerNorm affine params
    returns      : (..., H)  same dtype as x1
    """
    H = x1.shape[-1]
    lead_shape = x1.shape[:-1]

    xs = [x1.reshape(-1, H), x2.reshape(-1, H)]
    if x3 is not None:
        xs.append(x3.reshape(-1, H))
    N = xs[0].shape[0]

    # Sublane multiple: 8 for 32-bit dtypes, 16 for packed (bf16 etc.).
    sublane_mult = 8 if jnp.dtype(x1.dtype).itemsize >= 4 else 16
    if tile_m is None:
        tile_m = _pick_tile_m(N, sublane_mult)
    else:
        tile_m = max(sublane_mult, _round_up(tile_m, sublane_mult))

    g2 = gamma.reshape(1, H).astype(jnp.float32)
    b2 = beta.reshape(1, H).astype(jnp.float32)

    # Full hidden dim on the lane axis (lane-dense stores for H % 128 == 0).
    # TODO(synk): if the model's H is small (e.g. 64), consider padding H to
    # 128 at the model level for fully unmasked stores.
    row_spec = pl.BlockSpec((tile_m, H), lambda i: (i, 0))
    vec_spec = pl.BlockSpec((1, H), lambda i: (0, 0))

    kernel = _add3_ln_kernel if x3 is not None else _add2_ln_kernel
    grid = (pl.cdiv(N, tile_m),)   # partial last block handled by Pallas masking

    n_in = len(xs)
    elem = jnp.dtype(x1.dtype).itemsize
    cost = pl.CostEstimate(
        flops=8 * N * H,
        transcendentals=N,                               # one rsqrt per row
        bytes_accessed=(n_in + 1) * N * H * elem + 2 * H * 4,
    )

    out = pl.pallas_call(
        functools.partial(kernel, eps=eps),
        out_shape=jax.ShapeDtypeStruct((N, H), x1.dtype),
        grid=grid,
        in_specs=[row_spec] * n_in + [vec_spec, vec_spec],
        out_specs=row_spec,
        compiler_params=pltpu.CompilerParams(
            dimension_semantics=("parallel",)),
        cost_estimate=cost,
    )(*xs, g2, b2)

    return out.reshape(*lead_shape, H)


def _reference(x1, x2, x3, gamma, beta, eps=1e-5):
    x = x1 + x2 if x3 is None else x1 + x2 + x3
    x = x.astype(jnp.float32)
    mean = jnp.mean(x, axis=-1, keepdims=True)
    var = jnp.mean((x - mean) ** 2, axis=-1, keepdims=True)
    y = (x - mean) * jax.lax.rsqrt(var + eps) * gamma + beta
    return y.astype(x1.dtype)


if __name__ == "__main__":
    # Small shapes consistent with the module: batch=2, seq=8, hidden=128
    # (hidden chosen as a full 128-lane width for lane-dense stores).
    B, T, H = 2, 8, 128
    key = jax.random.PRNGKey(0)
    k1, k2, k3, k4, k5 = jax.random.split(key, 5)

    x1 = jax.random.normal(k1, (B, T, H), dtype=jnp.float32)
    x2 = jax.random.normal(k2, (B, T, H), dtype=jnp.float32)
    x3 = jax.random.normal(k3, (B, T, H), dtype=jnp.float32)
    gamma = 1.0 + 0.1 * jax.random.normal(k4, (H,), dtype=jnp.float32)
    beta = 0.1 * jax.random.normal(k5, (H,), dtype=jnp.float32)

    # Two-input path (x3=None), as in forward(x1, x2).
    out2 = add_and_norm(x1, x2, gamma=gamma, beta=beta)
    out2 = jax.block_until_ready(out2)
    ref2 = _reference(x1, x2, None, gamma, beta)
    assert out2.shape == (B, T, H)
    assert jnp.allclose(out2, ref2, atol=1e-5, rtol=1e-5), "2-input mismatch"

    # Three-input path, as in forward(x1, x2, x3).
    out3 = add_and_norm(x1, x2, x3, gamma=gamma, beta=beta)
    out3 = jax.block_until_ready(out3)
    ref3 = _reference(x1, x2, x3, gamma, beta)
    assert out3.shape == (B, T, H)
    assert jnp.allclose(out3, ref3, atol=1e-5, rtol=1e-5), "3-input mismatch"

    # Row count NOT a multiple of the tile / sublane count (exercises the
    # cdiv grid + masked partial last block — no wrapper pad/slice).
    Bo, To = 3, 5   # 15 rows
    y1 = jax.random.normal(k1, (Bo, To, H), dtype=jnp.float32)
    y2 = jax.random.normal(k2, (Bo, To, H), dtype=jnp.float32)
    outo = add_and_norm(y1, y2, gamma=gamma, beta=beta)
    outo = jax.block_until_ready(outo)
    refo = _reference(y1, y2, None, gamma, beta)
    assert outo.shape == (Bo, To, H)
    assert jnp.allclose(outo, refo, atol=1e-5, rtol=1e-5), "odd-row mismatch"

    print("KERNEL_OK")
</pallas_src>

<mosaic_0001>
module attributes {stable_mosaic.version = 11 : i64} {
  func.func @_add2_ln_kernel(%arg0: i32, %arg1: memref<16x128xf32, #tpu.memory_space<vmem>>, %arg2: memref<16x128xf32, #tpu.memory_space<vmem>>, %arg3: memref<1x128xf32, #tpu.memory_space<vmem>>, %arg4: memref<1x128xf32, #tpu.memory_space<vmem>>, %arg5: memref<16x128xf32, #tpu.memory_space<vmem>>) attributes {dimension_semantics = [#tpu.dimension_semantics<parallel>], iteration_bounds = array<i64: 1>, scalar_prefetch = 0 : i64, scratch_operands = 0 : i64, tpu.core_type = #tpu.core_type<tc>, window_params = [{transform_indices = @transform_0, window_bounds = array<i64: 16, 128>}, {transform_indices = @transform_1, window_bounds = array<i64: 16, 128>}, {pipeline_mode = #tpu.pipeline_mode<synchronous>, transform_indices = @transform_2, window_bounds = array<i64: 1, 128>}, {pipeline_mode = #tpu.pipeline_mode<synchronous>, transform_indices = @transform_3, window_bounds = array<i64: 1, 128>}, {transform_indices = @transform_4, window_bounds = array<i64: 16, 128>}]} {
    %c0 = arith.constant 0 : index
    %c0_0 = arith.constant 0 : index
    %0 = vector.load %arg1[%c0, %c0_0] : memref<16x128xf32, #tpu.memory_space<vmem>>, vector<16x128xf32>
    %c0_1 = arith.constant 0 : index
    %c0_2 = arith.constant 0 : index
    %1 = vector.load %arg2[%c0_1, %c0_2] : memref<16x128xf32, #tpu.memory_space<vmem>>, vector<16x128xf32>
    %2 = arith.addf %0, %1 : vector<16x128xf32>
    %cst = arith.constant dense<0.000000e+00> : vector<16xf32>
    %3 = vector.multi_reduction <add>, %2, %cst [1] : vector<16x128xf32> to vector<16xf32>
    %4 = vector.shape_cast %3 : vector<16xf32> to vector<16x1xf32>
    %cst_3 = arith.constant 1.280000e+02 : f32
    %5 = vector.broadcast %cst_3 : f32 to vector<16x1xf32>
    %6 = arith.divf %4, %5 : vector<16x1xf32>
    %7 = vector.broadcast %6 : vector<16x1xf32> to vector<16x128xf32>
    %8 = arith.subf %2, %7 : vector<16x128xf32>
    %9 = arith.mulf %8, %8 : vector<16x128xf32>
    %cst_4 = arith.constant dense<0.000000e+00> : vector<16xf32>
    %10 = vector.multi_reduction <add>, %9, %cst_4 [1] : vector<16x128xf32> to vector<16xf32>
    %11 = vector.shape_cast %10 : vector<16xf32> to vector<16x1xf32>
    %cst_5 = arith.constant 1.280000e+02 : f32
    %12 = vector.broadcast %cst_5 : f32 to vector<16x1xf32>
    %13 = arith.divf %11, %12 : vector<16x1xf32>
    %cst_6 = arith.constant 9.99999974E-6 : f32
    %14 = vector.broadcast %cst_6 : f32 to vector<16x1xf32>
    %15 = arith.addf %13, %14 : vector<16x1xf32>
    %16 = math.rsqrt %15 : vector<16x1xf32>
    %17 = vector.broadcast %16 : vector<16x1xf32> to vector<16x128xf32>
    %18 = arith.mulf %8, %17 : vector<16x128xf32>
    %c0_7 = arith.constant 0 : index
    %c0_8 = arith.constant 0 : index
    %19 = vector.load %arg3[%c0_7, %c0_8] : memref<1x128xf32, #tpu.memory_space<vmem>>, vector<1x128xf32>
    %20 = vector.broadcast %19 : vector<1x128xf32> to vector<16x128xf32>
    %21 = arith.mulf %18, %20 : vector<16x128xf32>
    %c0_9 = arith.constant 0 : index
    %c0_10 = arith.constant 0 : index
    %22 = vector.load %arg4[%c0_9, %c0_10] : memref<1x128xf32, #tpu.memory_space<vmem>>, vector<1x128xf32>
    %23 = vector.broadcast %22 : vector<1x128xf32> to vector<16x128xf32>
    %24 = arith.addf %21, %23 : vector<16x128xf32>
    %c0_11 = arith.constant 0 : index
    %c0_12 = arith.constant 0 : index
    %25 = vector.load %arg5[%c0_11, %c0_12] : memref<16x128xf32, #tpu.memory_space<vmem>>, vector<16x128xf32>
    tpu.vector_store %arg5[%c0_11, %c0_12], %24 {strides = array<i32>} : memref<16x128xf32, #tpu.memory_space<vmem>>, vector<16x128xf32>,
    return
  }
  func.func @transform_0(%arg0: i32) -> (i32, i32) {
    %c0_i32 = arith.constant 0 : i32
    %c0_i32_0 = arith.constant 0 : i32
    return %arg0, %c0_i32 : i32, i32
  }
  func.func @transform_1(%arg0: i32) -> (i32, i32) {
    %c0_i32 = arith.constant 0 : i32
    %c0_i32_0 = arith.constant 0 : i32
    return %arg0, %c0_i32 : i32, i32
  }
  func.func @transform_2(%arg0: i32) -> (i32, i32) {
    %c0_i32 = arith.constant 0 : i32
    %c0_i32_0 = arith.constant 0 : i32
    %c0_i32_1 = arith.constant 0 : i32
    return %c0_i32, %c0_i32_0 : i32, i32
  }
  func.func @transform_3(%arg0: i32) -> (i32, i32) {
    %c0_i32 = arith.constant 0 : i32
    %c0_i32_0 = arith.constant 0 : i32
    %c0_i32_1 = arith.constant 0 : i32
    return %c0_i32, %c0_i32_0 : i32, i32
  }
  func.func @transform_4(%arg0: i32) -> (i32, i32) {
    %c0_i32 = arith.constant 0 : i32
    %c0_i32_0 = arith.constant 0 : i32
    return %arg0, %c0_i32 : i32, i32
  }
}

</mosaic_0001>

<llo_original>
// kernel: tpu_custom_call.1
$region0: #{tpu_custom_call.1}
  #allocation0 [shape = 'u32[]', space=smem, size = 0x4, offset = 0x4, fixed_abs, tag = 'smem constant byte address 0x4 - core index']
  #allocation1 [shape = 'u32[144,128]{1,0:T(1,128)}', space=vmem, size = 0x12000, scoped, tag = 'internal scratch']
  %s0 = inlined_call_operand.hbm [shape: f32[16,128], index: 0, kind: input, shape index: {}]
  %s1 = inlined_call_operand.hbm [shape: f32[16,128], index: 1, kind: input, shape index: {}]
  %s2 = inlined_call_operand.vmem [shape: f32[1,128], index: 2, kind: input, shape index: {}]
  %s3 = inlined_call_operand.vmem [shape: f32[1,128], index: 3, kind: input, shape index: {}]
  %s4 = inlined_call_operand.hbm [shape: f32[16,128], index: 4, kind: output, shape index: {}]
  %s5 = sld [smem:[#allocation0]]
  $region34: #{tpu_custom_call.1} parent=0
    _
  %s7 = ssub.s32 1, %s5
  %s8 = scalar_select 0, %s7, %s5
  $region1: #{tpu_custom_call.1} parent=0
    #allocation2 [shape = 'u8[8192]{0}', space=vmem, size = 0x2000, scoped, tag = 'input window, operand 0, single buffered']
    #allocation3 [shape = 's32[1]{0}', space=sflag, size = 0x4, scoped, tag = 'scoped memory for tpu_custom_call.1']
    #allocation4 [shape = 's32[1]{0}', space=sflag, size = 0x4, scoped, tag = 'scoped memory for tpu_custom_call.1']
    #allocation5 [shape = 'u8[8192]{0}', space=vmem, size = 0x2000, scoped, tag = 'input window, operand 1, single buffered']
    #allocation6 [shape = 's32[1]{0}', space=sflag, size = 0x4, scoped, tag = 'scoped memory for tpu_custom_call.1']
    #allocation7 [shape = 'u8[8192]{0}', space=vmem, size = 0x2000, scoped, tag = 'output window, operand 0, single buffered']
    %9 = vsyncpa [#allocation3], 0
    %10 = vsyncpa [#allocation6], 0
    %11 = vsyncpa [#allocation4], 0
    // Predicated region
    $region2: #{tpu_custom_call.1} parent=1 // pred_check
      _
    $region3: #{tpu_custom_call.1} parent=1 // pred_check_branch
      %13 = sbr.rel (0) target = $region5
    $region4: #{tpu_custom_call.1} parent=1 // pred_region
      %s15 = ssub.s32 256, 256
      %16 = vsyncadd [#allocation3], %s15
      %s17 = sshll.u32 [#allocation2], 4
      %s18 = int_to_ptr.vmem [resolvable:$true] %s17
      %23 = dma.hbm_to_vmem [thread:$0]  %s0, 256, %s18, [#allocation3], 128, 128, 8
    $region5: #{tpu_custom_call.1} parent=1 // pred_fallthru
      _
    // Predicated region
    $region6: #{tpu_custom_call.1} parent=1 // pred_check
      _
    $region7: #{tpu_custom_call.1} parent=1 // pred_check_branch
      %25 = sbr.rel (0) target = $region9
    $region8: #{tpu_custom_call.1} parent=1 // pred_region
      %s27 = ssub.s32 256, 256
      %28 = vsyncadd [#allocation6], %s27
      %s29 = sshll.u32 [#allocation5], 4
      %s30 = int_to_ptr.vmem [resolvable:$true] %s29
      %35 = dma.hbm_to_vmem [thread:$0]  %s1, 256, %s30, [#allocation6], 128, 128, 8
    $region9: #{tpu_custom_call.1} parent=1 // pred_fallthru
      _
    // Predicated region
    $region10: #{tpu_custom_call.1} parent=1 // pred_check
      _
    $region11: #{tpu_custom_call.1} parent=1 // pred_check_branch
      %37 = sbr.rel (0) target = $region13
    $region12: #{tpu_custom_call.1} parent=1 // pred_region
      _
    $region13: #{tpu_custom_call.1} parent=1 // pred_fallthru
      _
    // Predicated region
    $region14: #{tpu_custom_call.1} parent=1 // pred_check
      _
    $region15: #{tpu_custom_call.1} parent=1 // pred_check_branch
      %39 = sbr.rel (0) target = $region17
    $region16: #{tpu_custom_call.1} parent=1 // pred_region
      _
    $region17: #{tpu_custom_call.1} parent=1 // pred_fallthru
      _
    // Predicated region
    $region18: #{tpu_custom_call.1} parent=1 // pred_check
      _
    $region19: #{tpu_custom_call.1} parent=1 // pred_check_branch
      %41 = sbr.rel (0) target = $region21
    $region20: #{tpu_custom_call.1} parent=1 // pred_region
      %42 = dma.done [#allocation3], 256
    $region21: #{tpu_custom_call.1} parent=1 // pred_fallthru
      _
    // Predicated region
    $region22: #{tpu_custom_call.1} parent=1 // pred_check
      _
    $region23: #{tpu_custom_call.1} parent=1 // pred_check_branch
      %44 = sbr.rel (0) target = $region25
    $region24: #{tpu_custom_call.1} parent=1 // pred_region
      %45 = dma.done [#allocation6], 256
    $region25: #{tpu_custom_call.1} parent=1 // pred_fallthru
      _
    %v46 = vld [vmem:[#allocation2] sm:$0xff]
    %v47 = vld [vmem:[#allocation2 + $0x8] sm:$0xff]
    %v48 = vld [vmem:[#allocation5] sm:$0xff]
    %v49 = vld [vmem:[#allocation5 + $0x8] sm:$0xff]
    %v50 = vadd.f32 %v46, %v48
    %v51 = vadd.f32 %v47, %v49
    %52 = vadd.xlane.f32.xlu0 %v50
    %v53 = vpop.xlane.xlu0 %52
    %54 = vadd.xlane.f32.xlu0 %v51
    %v55 = vpop.xlane.xlu0 %54
    %v56 = vrcp.pop 128.0
    %v57 = vmul.f32 %v53, %v56
    %v58 = vmul.f32 %v55, %v56
    %v59 = vsub.f32 %v50, %v57
    %v60 = vsub.f32 %v51, %v58
    %v61 = vmul.f32 %v59, %v59
    %v62 = vmul.f32 %v60, %v60
    %63 = vadd.xlane.f32.xlu0 %v61
    %v64 = vpop.xlane.xlu0 %63
    %65 = vadd.xlane.f32.xlu0 %v62
    %v66 = vpop.xlane.xlu0 %65
    %v67 = vmul.f32 %v64, %v56
    %v68 = vmul.f32 %v66, %v56
    %v69 = vadd.f32 %v67, 1e-05
    %v70 = vadd.f32 %v68, 1e-05
    %v71 = vrsqrt.pop %v69
    %v72 = vrsqrt.pop %v70
    %v73 = vmul.f32 %v59, %v71
    %v74 = vmul.f32 %v60, %v72
    %v75 = vld [vmem:[%s2] sm:$0x1]
    %v77 = vlaneseq
    %v78 = vshrl.u32 %v77, 7
    %v79 = vsub.s32 0, %v78
    %v80 = vrot.slane %v75, %v79
    %v82 = vmul.f32 %v73, %v80
    %v83 = vmul.f32 %v74, %v80
    %v84 = vld [vmem:[%s3] sm:$0x1]
    %v86 = vlaneseq
    %v87 = vshrl.u32 %v86, 7
    %v88 = vsub.s32 0, %v87
    %v89 = vrot.slane %v84, %v88
    %v91 = vadd.f32 %v82, %v89
    %v92 = vadd.f32 %v83, %v89
    %93 = vst [vmem:[#allocation7] sm:$0xff] %v91
    %94 = vst [vmem:[#allocation7 + $0x8] sm:$0xff] %v92
    // Predicated region
    $region26: #{tpu_custom_call.1} parent=1 // pred_check
      _
    $region27: #{tpu_custom_call.1} parent=1 // pred_check_branch
      %96 = sbr.rel (0) target = $region29
    $region28: #{tpu_custom_call.1} parent=1 // pred_region
      %s98 = ssub.s32 256, 256
      %99 = vsyncadd [#allocation4], %s98
      %s100 = sshll.u32 [#allocation7], 4
      %s101 = int_to_ptr.vmem [resolvable:$true] %s100
      %106 = dma.vmem_to_hbm [thread:$0]  %s101, 256, %s4, [#allocation4], 128, 128, 8
    $region29: #{tpu_custom_call.1} parent=1 // pred_fallthru
      _
    // Predicated region
    $region30: #{tpu_custom_call.1} parent=1 // pred_check
      _
    $region31: #{tpu_custom_call.1} parent=1 // pred_check_branch
      %108 = sbr.rel (0) target = $region33
    $region32: #{tpu_custom_call.1} parent=1 // pred_region
      %109 = dma.done [#allocation4], 256
    $region33: #{tpu_custom_call.1} parent=1 // pred_fallthru
      _
    %110 = vsyncpa [#allocation3], 1
    %111 = vsyncpa [#allocation6], 1
    %112 = vsyncpa [#allocation4], 1

</llo_original>
